<compile_context>
chip_gen: v7x
topology: tpu7x:2x2x1
jax: 0.10.0
libtpu: 0.0.40
codegen_flags: <defaults>
</compile_context>

<pallas_src>
import jax
import jax.numpy as jnp
from jax.experimental import pallas as pl
from jax.experimental.pallas import tpu as pltpu


def _round_up(x: int, m: int) -> int:
    return (x + m - 1) // m * m


def _pick_tk(Kp: int, cap: int) -> int:
    """Largest multiple of 128 that divides Kp and is <= cap (Kp % 128 == 0)."""
    cap = min(cap, Kp)
    best = 128
    for cand in range(128, cap + 1, 128):
        if Kp % cand == 0:
            best = cand
    return best


def _encoder_kernel(x_ref, wenc_ref, z_ref, acc_ref):
    """One partial-z tile: acc += x_tile @ wenc_tile over the inner K grid axis."""
    k = pl.program_id(2)

    @pl.when(k == 0)
    def _():
        acc_ref[...] = jnp.zeros_like(acc_ref)

    acc_ref[...] += jnp.dot(x_ref[...], wenc_ref[...],
                            preferred_element_type=jnp.float32)

    @pl.when(k == pl.num_programs(2) - 1)
    def _():
        z_ref[...] = acc_ref[...]


def prepare_downstream_params(params, eps: float = 1e-5):
    """One-time host/XLA prep: fold eval BN + encoder bias, cast wenc to bf16,
    pad only wenc's K rows to a multiple of 128. Returns device arrays."""
    wenc = jnp.asarray(params["wenc"], jnp.float32)
    K, z_dim = wenc.shape
    Kp = _round_up(K, 128)
    wenc_bf = wenc.astype(jnp.bfloat16)
    if Kp != K:
        wenc_bf = jnp.zeros((Kp, z_dim), jnp.bfloat16).at[:K, :].set(wenc_bf)

    # Eval BatchNorm1d:  y = (h - mean) * gamma/sqrt(var+eps) + beta
    inv_std = 1.0 / jnp.sqrt(jnp.asarray(params["bn_var"], jnp.float32) + eps)
    bn_scale = jnp.asarray(params["bn_gamma"], jnp.float32) * inv_std
    bn_shift = (jnp.asarray(params["bn_beta"], jnp.float32)
                - jnp.asarray(params["bn_mean"], jnp.float32) * bn_scale)
    w1 = jnp.asarray(params["w1"], jnp.float32)
    b1 = jnp.asarray(params["b1"], jnp.float32)
    benc = jnp.asarray(params["benc"], jnp.float32)
    # h = (x@Wenc + benc) @ w1 + b1, then BN  ->  (x@Wenc) @ w1f + b1f
    w1f = w1 * bn_scale
    b1f = (b1 + benc @ w1) * bn_scale + bn_shift

    return {
        "wenc": wenc_bf,                                   # (Kp, z_dim) bf16
        "w1": w1f,                                         # (z_dim, 64) f32
        "b1": b1f,                                         # (64,) f32
        "w2": jnp.asarray(params["w2"], jnp.float32),      # (64, cls) f32
        "b2": jnp.asarray(params["b2"], jnp.float32),      # (cls,) f32
    }


@jax.jit
def triple_vae_downstream_forward(x, prepped):
    """x: (B, C, L) float32.  Returns (B, downstream_cls_num) float32."""
    B, C, L = x.shape
    K = C * L
    wenc = prepped["wenc"]
    Kp, z_dim = wenc.shape
    if K > Kp:
        raise ValueError("input feature dim exceeds prepared encoder weight")

    # ---- static tiling decisions (shapes are static under jit) ----
    if B <= 256:
        tm, Bp = B, B                       # full-extent row block, no batch pad
    else:
        tm, Bp = 256, _round_up(B, 256)     # 256-row tiles (v6e/v7x MXU width)

    # K tile: largest 128-multiple divisor of Kp, target 4096 columns, bounded
    # so the double-buffered x + wenc tiles stay ~<= 8 MiB (v7x / v5e safe).
    vmem_tile_budget = 8 * 1024 * 1024
    tk_cap = max(128, min(4096, vmem_tile_budget // (4 * (tm + z_dim))))
    tk = _pick_tk(Kp, tk_cap)
    nk = Kp // tk
    # Split K into 2 parallel partial sums so v7x's 2nd TensorCore has work even
    # when there is a single row tile; free on single-TC chips (same tile count).
    S = 2 if (nk >= 2 and nk % 2 == 0) else 1
    kps = nk // S
    grid = (S, Bp // tm, kps)

    # ---- activations: bf16, pad only what is strictly needed ----
    x2d = x.reshape(B, K).astype(jnp.bfloat16)
    if Bp != B or Kp != K:
        x2d = jnp.zeros((Bp, Kp), jnp.bfloat16).at[:B, :K].set(x2d)

    z_partials = pl.pallas_call(
        _encoder_kernel,
        out_shape=jax.ShapeDtypeStruct((S, Bp, z_dim), jnp.float32),
        grid_spec=pltpu.PrefetchScalarGridSpec(
            num_scalar_prefetch=0,
            grid=grid,
            in_specs=[
                # x tile: rows follow i, columns walk this split's K range.
                pl.BlockSpec((tm, tk), lambda s, i, k: (i, s * kps + k)),
                # wenc tile: full-extent (unpadded) z_dim last dim.
                pl.BlockSpec((tk, z_dim), lambda s, i, k: (s * kps + k, 0)),
            ],
            # Output block index is constant across the inner K axis
            # (resident accumulator); do NOT make it depend on k.
            out_specs=pl.BlockSpec((None, tm, z_dim), lambda s, i, k: (s, i, 0)),
            scratch_shapes=[pltpu.VMEM((tm, z_dim), jnp.float32)],
        ),
        compiler_params=pltpu.CompilerParams(
            dimension_semantics=("parallel", "parallel", "arbitrary"),
            vmem_limit_bytes=32 * 1024 * 1024,   # <= scoped default on v6e/v7x
        ),
    )(x2d, wenc)

    # ---- tiny downstream head in XLA on the summed z (review item 10) ----
    z = jnp.sum(z_partials, axis=0)[:B]                     # (B, z_dim) f32
    h = jnp.maximum(z @ prepped["w1"] + prepped["b1"], 0.0)  # Linear+BN folded, ReLU
    return h @ prepped["w2"] + prepped["b2"]                 # Linear(64, cls)


def _reference(x, params):
    """Pure-JAX f32 reference of the same forward (eval-mode BN, no dropout)."""
    B, C, L = x.shape
    x2d = x.reshape(B, C * L).astype(jnp.float32)
    z = x2d @ params["wenc"] + params["benc"]
    h = z @ params["w1"] + params["b1"]
    inv_std = 1.0 / jnp.sqrt(params["bn_var"] + 1e-5)
    h = (h - params["bn_mean"]) * inv_std * params["bn_gamma"] + params["bn_beta"]
    h = jnp.maximum(h, 0.0)
    return h @ params["w2"] + params["b2"]


def init_params(key, in_dim, z_dim, cls_num):
    ks = jax.random.split(key, 6)
    scale = lambda d: 1.0 / jnp.sqrt(jnp.float32(d))
    return {
        "wenc": jax.random.normal(ks[0], (in_dim, z_dim), jnp.float32) * scale(in_dim),
        "benc": jax.random.normal(ks[1], (z_dim,), jnp.float32) * 0.01,
        "w1":   jax.random.normal(ks[2], (z_dim, 64), jnp.float32) * scale(z_dim),
        "b1":   jax.random.normal(ks[3], (64,), jnp.float32) * 0.01,
        "bn_gamma": jnp.ones((64,), jnp.float32) * 1.1,
        "bn_beta":  jnp.ones((64,), jnp.float32) * 0.05,
        "bn_mean":  jnp.ones((64,), jnp.float32) * 0.02,
        "bn_var":   jnp.ones((64,), jnp.float32) * 0.9,
        "w2":   jax.random.normal(ks[4], (64, cls_num), jnp.float32) * scale(64),
        "b2":   jax.random.normal(ks[5], (cls_num,), jnp.float32) * 0.01,
    }


def _run_case(B, C, L, z_dim, cls_num, key):
    k_x, k_p = jax.random.split(key)
    x = jax.random.normal(k_x, (B, C, L), jnp.float32)
    params = init_params(k_p, C * L, z_dim, cls_num)
    prepped = prepare_downstream_params(params)
    out = jax.block_until_ready(triple_vae_downstream_forward(x, prepped))
    assert out.shape == (B, cls_num)
    ref = _reference(x, params)
    denom = float(jnp.maximum(1.0, jnp.max(jnp.abs(ref))))
    max_err = float(jnp.max(jnp.abs(out - ref))) / denom
    assert max_err < 5e-2, f"max rel err {max_err}"


if __name__ == "__main__":
    key = jax.random.PRNGKey(0)
    # Small shapes consistent with the module: 3 modalities (II / Pleth / ABP),
    # short signal, z_dim=32, 5 downstream classes.  K=384 -> single K tile.
    _run_case(B=4, C=3, L=128, z_dim=32, cls_num=5, key=jax.random.fold_in(key, 0))
    # Longer signal: exercises K padding (16004 -> 16128), tk=2688, 6 K tiles,
    # the 2-way parallel K split, and an odd un-padded batch (B=3).
    _run_case(B=3, C=4, L=4001, z_dim=32, cls_num=5, key=jax.random.fold_in(key, 1))

    print("KERNEL_OK")
</pallas_src>

<mosaic_0001>
module attributes {stable_mosaic.version = 11 : i64} {
  func.func @_encoder_kernel(%arg0: i32, %arg1: i32, %arg2: i32, %arg3: memref<4x384xbf16, #tpu.memory_space<vmem>>, %arg4: memref<384x32xbf16, #tpu.memory_space<vmem>>, %arg5: memref<1x4x32xf32, #tpu.memory_space<vmem>>, %arg6: memref<4x32xf32, #tpu.memory_space<vmem>>) attributes {dimension_semantics = [#tpu.dimension_semantics<parallel>, #tpu.dimension_semantics<parallel>, #tpu.dimension_semantics<arbitrary>], iteration_bounds = array<i64: 1, 1, 1>, scalar_prefetch = 0 : i64, scratch_operands = 1 : i64, tpu.core_type = #tpu.core_type<tc>, window_params = [{transform_indices = @transform_0, window_bounds = array<i64: 4, 384>}, {transform_indices = @transform_1, window_bounds = array<i64: 384, 32>}, {transform_indices = @transform_2, window_bounds = array<i64: 1, 4, 32>}]} {
    %c0_i32 = arith.constant 0 : i32
    %0 = arith.cmpi eq, %arg2, %c0_i32 : i32
    %1 = arith.extui %0 : i1 to i32
    %c0_i32_0 = arith.constant 0 : i32
    %2 = arith.cmpi ne, %1, %c0_i32_0 : i32
    scf.if %2 {
      %cst_10 = arith.constant 0.000000e+00 : f32
      %12 = vector.broadcast %cst_10 : f32 to vector<4x32xf32>
      %c0_11 = arith.constant 0 : index
      %c0_12 = arith.constant 0 : index
      %13 = vector.load %arg6[%c0_11, %c0_12] : memref<4x32xf32, #tpu.memory_space<vmem>>, vector<4x32xf32>
      tpu.vector_store %arg6[%c0_11, %c0_12], %12 {strides = array<i32>} : memref<4x32xf32, #tpu.memory_space<vmem>>, vector<4x32xf32>,
    } else {
    }
    %c0 = arith.constant 0 : index
    %c0_1 = arith.constant 0 : index
    %3 = vector.load %arg6[%c0, %c0_1] : memref<4x32xf32, #tpu.memory_space<vmem>>, vector<4x32xf32>
    %c0_2 = arith.constant 0 : index
    %c0_3 = arith.constant 0 : index
    %4 = vector.load %arg3[%c0_2, %c0_3] : memref<4x384xbf16, #tpu.memory_space<vmem>>, vector<4x384xbf16>
    %c0_4 = arith.constant 0 : index
    %c0_5 = arith.constant 0 : index
    %5 = vector.load %arg4[%c0_4, %c0_5] : memref<384x32xbf16, #tpu.memory_space<vmem>>, vector<384x32xbf16>
    %cst = arith.constant dense<0.000000e+00> : vector<4x32xf32>
    %6 = tpu.matmul %4, %5, %cst {dimension_numbers = #tpu.dot_dimension_numbers<[1], [0], [0], [1], [0, 0, 1, 1], [], []>} : vector<4x384xbf16>, vector<384x32xbf16>, vector<4x32xf32> -> vector<4x32xf32>
    %7 = arith.addf %3, %6 : vector<4x32xf32>
    %c0_6 = arith.constant 0 : index
    %c0_7 = arith.constant 0 : index
    %8 = vector.load %arg6[%c0_6, %c0_7] : memref<4x32xf32, #tpu.memory_space<vmem>>, vector<4x32xf32>
    tpu.vector_store %arg6[%c0_6, %c0_7], %7 {strides = array<i32>} : memref<4x32xf32, #tpu.memory_space<vmem>>, vector<4x32xf32>,
    %c0_i32_8 = arith.constant 0 : i32
    %9 = arith.cmpi eq, %arg2, %c0_i32_8 : i32
    %10 = arith.extui %9 : i1 to i32
    %c0_i32_9 = arith.constant 0 : i32
    %11 = arith.cmpi ne, %10, %c0_i32_9 : i32
    scf.if %11 {
      %c0_10 = arith.constant 0 : index
      %c0_11 = arith.constant 0 : index
      %12 = vector.load %arg6[%c0_10, %c0_11] : memref<4x32xf32, #tpu.memory_space<vmem>>, vector<4x32xf32>
      %c0_12 = arith.constant 0 : index
      %c0_13 = arith.constant 0 : index
      %c0_14 = arith.constant 0 : index
      %13 = vector.load %arg5[%c0_12, %c0_13, %c0_14] : memref<1x4x32xf32, #tpu.memory_space<vmem>>, vector<1x4x32xf32>
      %14 = vector.shape_cast %13 : vector<1x4x32xf32> to vector<4x32xf32>
      %15 = vector.shape_cast %12 : vector<4x32xf32> to vector<1x4x32xf32>
      tpu.vector_store %arg5[%c0_12, %c0_13, %c0_14], %15 {strides = array<i32>} : memref<1x4x32xf32, #tpu.memory_space<vmem>>, vector<1x4x32xf32>,
    } else {
    }
    return
  }
  func.func @transform_0(%arg0: i32, %arg1: i32, %arg2: i32) -> (i32, i32) {
    %c1_i32 = arith.constant 1 : i32
    %0 = arith.muli %arg0, %c1_i32 : i32
    %1 = arith.addi %0, %arg2 : i32
    %c0_i32 = arith.constant 0 : i32
    return %arg1, %1 : i32, i32
  }
  func.func @transform_1(%arg0: i32, %arg1: i32, %arg2: i32) -> (i32, i32) {
    %c1_i32 = arith.constant 1 : i32
    %0 = arith.muli %arg0, %c1_i32 : i32
    %1 = arith.addi %0, %arg2 : i32
    %c0_i32 = arith.constant 0 : i32
    %c0_i32_0 = arith.constant 0 : i32
    return %1, %c0_i32 : i32, i32
  }
  func.func @transform_2(%arg0: i32, %arg1: i32, %arg2: i32) -> (i32, i32, i32) {
    %c0_i32 = arith.constant 0 : i32
    %c0_i32_0 = arith.constant 0 : i32
    return %arg0, %arg1, %c0_i32 : i32, i32, i32
  }
}

</mosaic_0001>

<llo_original>
// kernel: triple_vae_downstream_forward.1
$region0: #{triple_vae_downstream_forward.1}
  #allocation0 [shape = 'u32[]', space=smem, size = 0x4, offset = 0x4, fixed_abs, tag = 'smem constant byte address 0x4 - core index']
  #allocation1 [shape = 'u32[144,128]{1,0:T(1,128)}', space=vmem, size = 0x12000, scoped, tag = 'internal scratch']
  #allocation2 [shape = 'f32[4,32]{1,0:T(4,128)}', space=vmem, size = 0x800, scoped, tag = 'scratch operand']
  %s0 = inlined_call_operand.vmem [shape: bf16[4,384], index: 0, kind: input, shape index: {}]
  %s1 = inlined_call_operand.vmem [shape: bf16[384,32], index: 1, kind: input, shape index: {}]
  %s2 = inlined_call_operand.vmem [shape: f32[1,4,32], index: 2, kind: output, shape index: {}]
  %s3 = sld [smem:[#allocation0]]
  $region26: #{triple_vae_downstream_forward.1} parent=0
    _
  %s5 = ssub.s32 1, %s3
  %s6 = scalar_select 0, %s5, %s3
  // Predicated region
  $region2: #{triple_vae_downstream_forward.1} parent=0 // pred_check
    _
  $region3: #{triple_vae_downstream_forward.1} parent=0 // pred_check_branch
    %8 = sbr.rel (0) target = $region5
  $region4: #{triple_vae_downstream_forward.1} parent=0 // pred_region
    %s9 = sadd.s32 0, 0
    %s10 = smul.u32 3, %s9
    %p11 = scmp.lt.s32.totalorder %s10, 2
    %s12 = scalar_select %p11, %s10, 2
    %s13 = smul.addr %s12, 2
    %s14 = scalar_lea.vmem %s0, %s13
    %s15 = sadd.s32 0, 0
    %s16 = smul.u32 3, %s15
  $region5: #{triple_vae_downstream_forward.1} parent=0 // pred_fallthru
    _
  // Predicated region
  $region6: #{triple_vae_downstream_forward.1} parent=0 // pred_check
    _
  $region7: #{triple_vae_downstream_forward.1} parent=0 // pred_check_branch
    %18 = sbr.rel (0) target = $region9
  $region8: #{triple_vae_downstream_forward.1} parent=0 // pred_region
    %s19 = sadd.s32 0, 0
    %s20 = smul.u32 48, %s19
    %p21 = scmp.lt.s32.totalorder %s20, 47
    %s22 = scalar_select %p21, %s20, 47
    %s23 = smul.addr %s22, 4
    %s24 = scalar_lea.vmem %s1, %s23
    %s25 = sadd.s32 0, 0
    %s26 = smul.u32 48, %s25
  $region9: #{triple_vae_downstream_forward.1} parent=0 // pred_fallthru
    _
  %s27 = sadd.s32 0, 0
  %s28 = smul.u32 3, %s27
  %p29 = scmp.lt.s32.totalorder %s28, 2
  %s30 = scalar_select %p29, %s28, 2
  %s31 = smul.addr %s30, 2
  %s32 = scalar_lea.vmem %s0, %s31
  %s33 = sadd.s32 0, 0
  %s34 = smul.u32 48, %s33
  %p35 = scmp.lt.s32.totalorder %s34, 47
  %s36 = scalar_select %p35, %s34, 47
  %s37 = smul.addr %s36, 4
  %s38 = scalar_lea.vmem %s1, %s37
  %s39 = sadd.s32 0, 0
  %s40 = smul.u32 3, %s39
  %p41 = scmp.lt.s32.totalorder %s40, 2
  %s42 = scalar_select %p41, %s40, 2
  %s43 = smul.addr %s42, 2
  %s44 = scalar_lea.vmem %s0, %s43
  %s45 = sadd.s32 0, 0
  %s46 = smul.u32 3, %s45
  %s47 = sadd.s32 0, 0
  %s48 = smul.u32 48, %s47
  %p49 = scmp.lt.s32.totalorder %s48, 47
  %s50 = scalar_select %p49, %s48, 47
  %s51 = smul.addr %s50, 4
  %s52 = scalar_lea.vmem %s1, %s51
  %s53 = sadd.s32 0, 0
  %s54 = smul.u32 48, %s53
  %p56 = scmp.eq.s32.totalorder 0, 0
  // Predicated region
  $region10: #{triple_vae_downstream_forward.1} parent=0 // pred_check
    %p57 = pneg %p56
  $region11: #{triple_vae_downstream_forward.1} parent=0 // pred_check_branch
    %59 = sbr.rel (%p57) target = $region13
  $region12: #{triple_vae_downstream_forward.1} parent=0 // pred_region
    %vm60 = vcmask 257024
    %61 = vst.msk [vmem:[#allocation2] sm:$0xf] %vm60, 0.0
  $region13: #{triple_vae_downstream_forward.1} parent=0 // pred_fallthru
    _
  %v62 = vld [vmem:[#allocation2] sm:$0xf]
  %v63 = vld [vmem:[%s44] sm:$0x3f]
  %v64 = vld [vmem:[%s52] sm:$0xf]
  %v65 = vld [vmem:[%s52 + $0x4] sm:$0xf]
  %v66 = vld [vmem:[%s52 + $0x8] sm:$0xf]
  %v67 = vld [vmem:[%s52 + $0xc] sm:$0xf]
  %v68 = vld [vmem:[%s52 + $0x10] sm:$0xf]
  %v69 = vld [vmem:[%s52 + $0x14] sm:$0xf]
  %v70 = vld [vmem:[%s52 + $0x18] sm:$0xf]
  %v71 = vld [vmem:[%s52 + $0x1c] sm:$0xf]
  %v72 = vld [vmem:[%s52 + $0x20] sm:$0xf]
  %v73 = vld [vmem:[%s52 + $0x24] sm:$0xf]
  %v74 = vld [vmem:[%s52 + $0x28] sm:$0xf]
  %v75 = vld [vmem:[%s52 + $0x2c] sm:$0xf]
  %v76 = vld [vmem:[%s52 + $0x30] sm:$0xf]
  %v77 = vld [vmem:[%s52 + $0x34] sm:$0xf]
  %v78 = vld [vmem:[%s52 + $0x38] sm:$0xf]
  %v79 = vld [vmem:[%s52 + $0x3c] sm:$0xf]
  %v80 = vld [vmem:[%s52 + $0x40] sm:$0xf]
  %v81 = vld [vmem:[%s52 + $0x44] sm:$0xf]
  %v82 = vld [vmem:[%s52 + $0x48] sm:$0xf]
  %v83 = vld [vmem:[%s52 + $0x4c] sm:$0xf]
  %v84 = vld [vmem:[%s52 + $0x50] sm:$0xf]
  %v85 = vld [vmem:[%s52 + $0x54] sm:$0xf]
  %v86 = vld [vmem:[%s52 + $0x58] sm:$0xf]
  %v87 = vld [vmem:[%s52 + $0x5c] sm:$0xf]
  %v88 = vld [vmem:[%s52 + $0x60] sm:$0xf]
  %v89 = vld [vmem:[%s52 + $0x64] sm:$0xf]
  %v90 = vld [vmem:[%s52 + $0x68] sm:$0xf]
  %v91 = vld [vmem:[%s52 + $0x6c] sm:$0xf]
  %v92 = vld [vmem:[%s52 + $0x70] sm:$0xf]
  %v93 = vld [vmem:[%s52 + $0x74] sm:$0xf]
  %v94 = vld [vmem:[%s52 + $0x78] sm:$0xf]
  %v95 = vld [vmem:[%s52 + $0x7c] sm:$0xf]
  %v96 = vld [vmem:[%s52 + $0x80] sm:$0xf]
  %v97 = vld [vmem:[%s52 + $0x84] sm:$0xf]
  %v98 = vld [vmem:[%s52 + $0x88] sm:$0xf]
  %v99 = vld [vmem:[%s52 + $0x8c] sm:$0xf]
  %v100 = vld [vmem:[%s52 + $0x90] sm:$0xf]
  %v101 = vld [vmem:[%s52 + $0x94] sm:$0xf]
  %v102 = vld [vmem:[%s52 + $0x98] sm:$0xf]
  %v103 = vld [vmem:[%s52 + $0x9c] sm:$0xf]
  %v104 = vld [vmem:[%s52 + $0xa0] sm:$0xf]
  %v105 = vld [vmem:[%s52 + $0xa4] sm:$0xf]
  %v106 = vld [vmem:[%s52 + $0xa8] sm:$0xf]
  %v107 = vld [vmem:[%s52 + $0xac] sm:$0xf]
  %v108 = vld [vmem:[%s52 + $0xb0] sm:$0xf]
  %v109 = vld [vmem:[%s52 + $0xb4] sm:$0xf]
  %v110 = vld [vmem:[%s52 + $0xb8] sm:$0xf]
  %v111 = vld [vmem:[%s52 + $0xbc] sm:$0xf]
  %v113 = vcombine.high %v63, %v63
  %v115 = vunpack.c.l.s4 1983009808
  %v116 = vunpack.c.0.s8 %v115
  %v117 = vlaneseq
  %v118 = vshrl.u32 %v117, 7
  %v119 = vsub.s32 %v116, %v118
  %v120 = vrot.slane %v63, %v119
  %v122 = vunpack.c.l.s4 1983009808
  %v123 = vunpack.c.0.s8 %v122
  %v124 = vlaneseq
  %v125 = vshrl.u32 %v124, 7
  %v126 = vsub.s32 %v123, %v125
  %v127 = vrot.slane %v113, %v126
  %v128 = vcombine.high %v120, %v120
  %v180 = vunpack.c.l.b16 %v64
  %v181 = vunpack.c.l.b16 %v65
  %v182 = vunpack.c.l.b16 %v66
  %v183 = vunpack.c.l.b16 %v67
  %v184 = vunpack.c.l.b16 %v68
  %v185 = vunpack.c.l.b16 %v69
  %v186 = vunpack.c.l.b16 %v70
  %v187 = vunpack.c.l.b16 %v71
  %v188 = vunpack.c.l.b16 %v72
  %v189 = vunpack.c.l.b16 %v73
  %v190 = vunpack.c.l.b16 %v74
  %v191 = vunpack.c.l.b16 %v75
  %v192 = vunpack.c.l.b16 %v76
  %v193 = vunpack.c.l.b16 %v77
  %v194 = vunpack.c.l.b16 %v78
  %v195 = vunpack.c.l.b16 %v79
  %v196 = vunpack.c.l.b16 %v80
  %v197 = vunpack.c.l.b16 %v81
  %v198 = vunpack.c.l.b16 %v82
  %v199 = vunpack.c.l.b16 %v83
  %v200 = vunpack.c.l.b16 %v84
  %v201 = vunpack.c.l.b16 %v85
  %v202 = vunpack.c.l.b16 %v86
  %v203 = vunpack.c.l.b16 %v87
  %v204 = vunpack.c.l.b16 %v88
  %v205 = vunpack.c.l.b16 %v89
  %v206 = vunpack.c.l.b16 %v90
  %v207 = vunpack.c.l.b16 %v91
  %v208 = vunpack.c.l.b16 %v92
  %v209 = vunpack.c.l.b16 %v93
  %v210 = vunpack.c.l.b16 %v94
  %v211 = vunpack.c.l.b16 %v95
  %v212 = vunpack.c.l.b16 %v96
  %v213 = vunpack.c.l.b16 %v97
  %v214 = vunpack.c.l.b16 %v98
  %v215 = vunpack.c.l.b16 %v99
  %v216 = vunpack.c.l.b16 %v100
  %v217 = vunpack.c.l.b16 %v101
  %v218 = vunpack.c.l.b16 %v102
  %v219 = vunpack.c.l.b16 %v103
  %v220 = vunpack.c.l.b16 %v104
  %v221 = vunpack.c.l.b16 %v105
  %v222 = vunpack.c.l.b16 %v106
  %v223 = vunpack.c.l.b16 %v107
  %v224 = vunpack.c.l.b16 %v108
  %v225 = vunpack.c.l.b16 %v109
  %v226 = vunpack.c.l.b16 %v110
  %v227 = vunpack.c.l.b16 %v111
  %v228 = vpack.c.b16 %v181, %v180
  %v229 = vpack.c.b16 %v183, %v182
  %v230 = vpack.c.b16 %v185, %v184
  %v231 = vpack.c.b16 %v187, %v186
  %v232 = vpack.c.b16 %v189, %v188
  %v233 = vpack.c.b16 %v191, %v190
  %v234 = vpack.c.b16 %v193, %v192
  %v235 = vpack.c.b16 %v195, %v194
  %v236 = vpack.c.b16 %v197, %v196
  %v237 = vpack.c.b16 %v199, %v198
  %v238 = vpack.c.b16 %v201, %v200
  %v239 = vpack.c.b16 %v203, %v202
  %v240 = vpack.c.b16 %v205, %v204
  %v241 = vpack.c.b16 %v207, %v206
  %v242 = vpack.c.b16 %v209, %v208
  %v243 = vpack.c.b16 %v211, %v210
  %v244 = vpack.c.b16 %v213, %v212
  %v245 = vpack.c.b16 %v215, %v214
  %v246 = vpack.c.b16 %v217, %v216
  %v247 = vpack.c.b16 %v219, %v218
  %v248 = vpack.c.b16 %v221, %v220
  %v249 = vpack.c.b16 %v223, %v222
  %v250 = vpack.c.b16 %v225, %v224
  %v251 = vpack.c.b16 %v227, %v226
  %276 = vmatprep.subr.bf16.mxu0 0
  %277 = vmatpush1.bf16.msra.mxu0 %v228
  %278 = vmatprep.subr.bf16.mxu0 0
  %279 = vmatpush1.bf16.msra.mxu0 %v229
  %280 = vmatprep.subr.bf16.mxu0 0
  %281 = vmatpush1.bf16.msra.mxu0 %v230
  %282 = vmatprep.subr.bf16.mxu0 0
  %283 = vmatpush1.bf16.msra.mxu0 %v231
  %284 = vmatprep.subr.bf16.mxu0 0
  %285 = vmatpush1.bf16.msra.mxu0 %v232
  %286 = vmatprep.subr.bf16.mxu0 0
  %287 = vmatpush1.bf16.msra.mxu0 %v233
  %288 = vmatprep.subr.bf16.mxu0 0
  %289 = vmatpush1.bf16.msra.mxu0 %v234
  %290 = vmatprep.subr.bf16.mxu0 0
  %291 = vmatpush1.bf16.msra.mxu0 %v235
  %292 = vmatprep.subr.bf16.mxu0 0
  %293 = vmatpush1.bf16.msra.mxu0 %v236
  %294 = vmatprep.subr.bf16.mxu0 0
  %295 = vmatpush1.bf16.msra.mxu0 %v237
  %296 = vmatprep.subr.bf16.mxu0 0
  %297 = vmatpush1.bf16.msra.mxu0 %v238
  %298 = vmatprep.subr.bf16.mxu0 0
  %299 = vmatpush1.bf16.msra.mxu0 %v239
  %300 = vmatprep.subr.bf16.mxu0 0
  %301 = vmatpush1.bf16.msra.mxu0 %v240
  %302 = vmatprep.subr.bf16.mxu0 0
  %303 = vmatpush1.bf16.msra.mxu0 %v241
  %304 = vmatprep.subr.bf16.mxu0 0
  %305 = vmatpush1.bf16.msra.mxu0 %v242
  %306 = vmatprep.subr.bf16.mxu0 0
  %307 = vmatpush1.bf16.msra.mxu0 %v243
  %308 = vmatprep.mubr.bf16.mxu0 %v128
  %309 = vmatmul.mubr.bf16.gmra.mrb[0].mxu0 %v120
  %v310 = vpop.f32.mrb[0].mxu0
  %v311 = vadd.f32 0.0, %v310
  %v312 = vpop.f32.mrb[0].mxu0
  %v313 = vpop.f32.mrb[0].mxu0
  %v314 = vpop.f32.mrb[0].mxu0
  %315 = vdwg.mxu0
  %316 = vmatprep.subr.bf16.mxu0 0
  %317 = vmatpush1.bf16.msra.mxu0 %v244
  %318 = vmatprep.subr.bf16.mxu0 0
  %319 = vmatpush1.bf16.msra.mxu0 %v245
  %320 = vmatprep.subr.bf16.mxu0 0
  %321 = vmatpush1.bf16.msra.mxu0 %v246
  %322 = vmatprep.subr.bf16.mxu0 0
  %323 = vmatpush1.bf16.msra.mxu0 %v247
  %324 = vmatprep.subr.bf16.mxu0 0
  %325 = vmatpush1.bf16.msra.mxu0 %v248
  %326 = vmatprep.subr.bf16.mxu0 0
  %327 = vmatpush1.bf16.msra.mxu0 %v249
  %328 = vmatprep.subr.bf16.mxu0 0
  %329 = vmatpush1.bf16.msra.mxu0 %v250
  %330 = vmatprep.subr.bf16.mxu0 0
  %331 = vmatpush1.bf16.msra.mxu0 %v251
  %332 = vmatprep.subr.bf16.mxu0 0
  %333 = vmatpush1.bf16.msra.mxu0 0
  %334 = vmatprep.subr.bf16.mxu0 0
  %335 = vmatpush1.bf16.msra.mxu0 0
  %336 = vmatprep.subr.bf16.mxu0 0
  %337 = vmatpush1.bf16.msra.mxu0 0
  %338 = vmatprep.subr.bf16.mxu0 0
  %339 = vmatpush1.bf16.msra.mxu0 0
  %340 = vmatprep.subr.bf16.mxu0 0
  %341 = vmatpush1.bf16.msra.mxu0 0
  %342 = vmatprep.subr.bf16.mxu0 0
  %343 = vmatpush1.bf16.msra.mxu0 0
  %344 = vmatprep.subr.bf16.mxu0 0
  %345 = vmatpush1.bf16.msra.mxu0 0
  %346 = vmatprep.subr.bf16.mxu0 0
  %347 = vmatpush1.bf16.msra.mxu0 0
  %348 = vmatprep.mubr.bf16.mxu0 0
  %349 = vmatmul.mubr.bf16.gmra.mrb[0].mxu0 %v127
  %v350 = vpop.f32.mrb[0].mxu0
  %v351 = vadd.f32 %v311, %v350
  %v352 = vpop.f32.mrb[0].mxu0
  %v353 = vpop.f32.mrb[0].mxu0
  %v354 = vpop.f32.mrb[0].mxu0
  %355 = vdwg.mxu0
  %v356 = vadd.f32 %v62, %v351
  %vm357 = vcmask 257024
  %358 = vst.msk [vmem:[#allocation2] sm:$0xf] %vm357, %v356
  // Predicated region
  $region14: #{triple_vae_downstream_forward.1} parent=0 // pred_check
    %p359 = pneg %p56
  $region15: #{triple_vae_downstream_forward.1} parent=0 // pred_check_branch
    %361 = sbr.rel (%p359) target = $region17
  $region16: #{triple_vae_downstream_forward.1} parent=0 // pred_region
    %v362 = vld [vmem:[#allocation2] sm:$0xf]
    %363 = vst.msk [vmem:[%s2] sm:$0xf] %vm357, %v362
  $region17: #{triple_vae_downstream_forward.1} parent=0 // pred_fallthru
    _
  // Predicated region
  $region18: #{triple_vae_downstream_forward.1} parent=0 // pred_check
    _
  $region19: #{triple_vae_downstream_forward.1} parent=0 // pred_check_branch
    %365 = sbr.rel (0) target = $region21
  $region20: #{triple_vae_downstream_forward.1} parent=0 // pred_region
    _
  $region21: #{triple_vae_downstream_forward.1} parent=0 // pred_fallthru
    _
  // Predicated region
  $region22: #{triple_vae_downstream_forward.1} parent=0 // pred_check
    _
  $region23: #{triple_vae_downstream_forward.1} parent=0 // pred_check_branch
    %367 = sbr.rel (0) target = $region25
  $region24: #{triple_vae_downstream_forward.1} parent=0 // pred_region
    _
  $region25: #{triple_vae_downstream_forward.1} parent=0 // pred_fallthru
    _

</llo_original>
